<compile_context>
chip_gen: v6e
topology: v6e:2x2x1
jax: 0.10.0
libtpu: 0.0.40
codegen_flags: <defaults>
</compile_context>

<pallas_src>
import jax
import jax.numpy as jnp
from jax.experimental import pallas as pl
from jax.experimental.pallas import tpu as pltpu

_LANE = 128
_SUBLANE_ALIGN = 32                     # keeps f32(8)/bf16(16)/int8(32) packing aligned
_VMEM_LIMIT_BYTES = 48 * 1024 * 1024    # safe on v5e/v6e (128 MiB) and v7x (64 MiB)
_MIN_SPLIT_ROWS = 1024                  # only force >=2 grid steps above ~512 rows/step


def _relu_kernel(x_ref, o_ref):
    # One VPU vmax per vreg; DMA/HBM is the bottleneck.
    o_ref[...] = jnp.maximum(x_ref[...], jnp.zeros((), dtype=x_ref.dtype))


def _pick_block_bytes() -> int:
    """~8 MiB blocks by default; ~10 MiB on v7x (64 MiB VMEM, ~3.2 TB/s HBM)."""
    try:
        info = pltpu.get_tpu_info()
        vmem = getattr(info, "vmem_capacity_bytes", None)
        if vmem is not None and vmem <= 64 * 1024 * 1024:
            return 10 * 1024 * 1024
    except Exception:
        pass
    return 8 * 1024 * 1024


def _relu_2d(x2d: jax.Array, rows: int, itemsize: int) -> jax.Array:
    """ReLU over a lane-dense (rows, 128) slab via a streaming pallas_call."""
    target_rows = max(
        _SUBLANE_ALIGN,
        (_pick_block_bytes() // (_LANE * itemsize)) // _SUBLANE_ALIGN * _SUBLANE_ALIGN,
    )
    if rows >= _MIN_SPLIT_ROWS:
        # Guarantee at least 2 grid steps (megacore sharding on v7x); round the
        # half-split up to a 32-sublane multiple so packed dtypes stay aligned.
        half = (pl.cdiv(rows, 2) + _SUBLANE_ALIGN - 1) // _SUBLANE_ALIGN * _SUBLANE_ALIGN
        block_rows = min(target_rows, half)
    else:
        # Tiny input: one full-extent block (always a legal BlockSpec).
        block_rows = rows
    grid = (pl.cdiv(rows, block_rows),)
    nbytes = rows * _LANE * itemsize

    return pl.pallas_call(
        _relu_kernel,
        out_shape=jax.ShapeDtypeStruct((rows, _LANE), x2d.dtype),
        grid=grid,
        in_specs=[pl.BlockSpec((block_rows, _LANE), lambda i: (i, 0))],
        out_specs=pl.BlockSpec((block_rows, _LANE), lambda i: (i, 0)),
        compiler_params=pltpu.CompilerParams(
            dimension_semantics=("parallel",),
            vmem_limit_bytes=_VMEM_LIMIT_BYTES,
        ),
        cost_estimate=pl.CostEstimate(
            flops=rows * _LANE,
            transcendentals=0,
            bytes_accessed=2 * nbytes,
        ),
    )(x2d)


def act_forward(x: jax.Array) -> jax.Array:
    """ReLU(x), matching nn.ReLU()(x) semantics (same shape, same dtype)."""
    orig_shape = x.shape
    n = x.size
    if n == 0:
        return x
    itemsize = jnp.dtype(x.dtype).itemsize

    rem = n % _LANE
    if rem == 0:
        # Common case: free bitcast to a lane-dense slab, no extra copies.
        rows = n // _LANE
        out2d = _relu_2d(jnp.reshape(x, (rows, _LANE)), rows, itemsize)
        return jnp.reshape(out2d, orig_shape)

    # Ragged size: kernel over the 128-aligned bulk, plain max on the <128 tail.
    bulk = n - rem
    flat = jnp.reshape(x, (-1,))
    tail_out = jnp.maximum(flat[bulk:], jnp.zeros((), dtype=x.dtype))
    if bulk == 0:
        return jnp.reshape(tail_out, orig_shape)
    rows = bulk // _LANE
    bulk_out = _relu_2d(jnp.reshape(flat[:bulk], (rows, _LANE)), rows, itemsize)
    return jnp.reshape(
        jnp.concatenate([jnp.reshape(bulk_out, (-1,)), tail_out]), orig_shape
    )


if __name__ == "__main__":
    key = jax.random.PRNGKey(0)

    # NCHW input matching the module usage: batch=2, channels=4, spatial=16x16.
    x = jax.random.normal(key, (2, 4, 16, 16), dtype=jnp.float32)
    y = act_forward(x)
    jax.block_until_ready(y)
    y_ref = jnp.maximum(x, 0.0)
    assert y.shape == x.shape and y.dtype == x.dtype
    assert bool(jnp.allclose(y, y_ref)), "mismatch vs reference ReLU (aligned path)"

    # Also exercise the ragged (size % 128 != 0) bulk + tail path.
    x2 = jax.random.normal(jax.random.PRNGKey(0), (3, 5, 7, 11), dtype=jnp.float32)
    y2 = act_forward(x2)
    jax.block_until_ready(y2)
    assert y2.shape == x2.shape and y2.dtype == x2.dtype
    assert bool(jnp.allclose(y2, jnp.maximum(x2, 0.0))), "mismatch (ragged path)"

    print("KERNEL_OK")
</pallas_src>

<mosaic_0001>
module attributes {stable_mosaic.version = 11 : i64} {
  func.func @_relu_kernel(%arg0: i32, %arg1: memref<16x128xf32, #tpu.memory_space<vmem>>, %arg2: memref<16x128xf32, #tpu.memory_space<vmem>>) attributes {dimension_semantics = [#tpu.dimension_semantics<parallel>], iteration_bounds = array<i64: 1>, scalar_prefetch = 0 : i64, scratch_operands = 0 : i64, tpu.core_type = #tpu.core_type<tc>, window_params = [{transform_indices = @transform_0, window_bounds = array<i64: 16, 128>}, {transform_indices = @transform_1, window_bounds = array<i64: 16, 128>}]} {
    %c0 = arith.constant 0 : index
    %c0_0 = arith.constant 0 : index
    %0 = vector.load %arg1[%c0, %c0_0] : memref<16x128xf32, #tpu.memory_space<vmem>>, vector<16x128xf32>
    %cst = arith.constant 0.000000e+00 : f32
    %1 = vector.broadcast %cst : f32 to vector<16x128xf32>
    %2 = arith.maximumf %0, %1 : vector<16x128xf32>
    %c0_1 = arith.constant 0 : index
    %c0_2 = arith.constant 0 : index
    %3 = vector.load %arg2[%c0_1, %c0_2] : memref<16x128xf32, #tpu.memory_space<vmem>>, vector<16x128xf32>
    tpu.vector_store %arg2[%c0_1, %c0_2], %2 {strides = array<i32>} : memref<16x128xf32, #tpu.memory_space<vmem>>, vector<16x128xf32>,
    return
  }
  func.func @transform_0(%arg0: i32) -> (i32, i32) {
    %c0_i32 = arith.constant 0 : i32
    %c0_i32_0 = arith.constant 0 : i32
    return %arg0, %c0_i32 : i32, i32
  }
  func.func @transform_1(%arg0: i32) -> (i32, i32) {
    %c0_i32 = arith.constant 0 : i32
    %c0_i32_0 = arith.constant 0 : i32
    return %arg0, %c0_i32 : i32, i32
  }
}

</mosaic_0001>

<llo_original>
// kernel: tpu_custom_call.1
$region0: #{tpu_custom_call.1}
  #allocation0 [shape = 'u32[]', space=smem, size = 0x4, offset = 0x4, fixed_abs, tag = 'smem constant byte address 0x4 - core index']
  #allocation1 [shape = 'u32[144,128]{1,0:T(1,128)}', space=vmem, size = 0x12000, scoped, tag = 'internal scratch']
  %s0 = inlined_call_operand.hbm [shape: f32[16,128], index: 0, kind: input, shape index: {}]
  %s1 = inlined_call_operand.hbm [shape: f32[16,128], index: 1, kind: output, shape index: {}]
  %s2 = sld [smem:[#allocation0]]
  $region18: #{tpu_custom_call.1} parent=0
    _
  %s4 = ssub.s32 1, %s2
  %s5 = scalar_select 0, %s4, %s2
  $region1: #{tpu_custom_call.1} parent=0
    #allocation2 [shape = 'u8[8192]{0}', space=vmem, size = 0x2000, scoped, tag = 'input window, operand 0, single buffered']
    #allocation3 [shape = 's32[1]{0}', space=sflag, size = 0x4, scoped, tag = 'scoped memory for tpu_custom_call.1']
    #allocation4 [shape = 's32[1]{0}', space=sflag, size = 0x4, scoped, tag = 'scoped memory for tpu_custom_call.1']
    #allocation5 [shape = 'u8[8192]{0}', space=vmem, size = 0x2000, scoped, tag = 'output window, operand 0, single buffered']
    %6 = vsyncpa [#allocation3], 0
    %7 = vsyncpa [#allocation4], 0
    // Predicated region
    $region2: #{tpu_custom_call.1} parent=1 // pred_check
      _
    $region3: #{tpu_custom_call.1} parent=1 // pred_check_branch
      %9 = sbr.rel (0) target = $region5
    $region4: #{tpu_custom_call.1} parent=1 // pred_region
      %s11 = ssub.s32 256, 256
      %12 = vsyncadd [#allocation3], %s11
      %s13 = sshll.u32 [#allocation2], 4
      %s14 = int_to_ptr.vmem [resolvable:$true] %s13
      %19 = dma.hbm_to_vmem [thread:$0]  %s0, 256, %s14, [#allocation3], 128, 128, 8
    $region5: #{tpu_custom_call.1} parent=1 // pred_fallthru
      _
    // Predicated region
    $region6: #{tpu_custom_call.1} parent=1 // pred_check
      _
    $region7: #{tpu_custom_call.1} parent=1 // pred_check_branch
      %21 = sbr.rel (0) target = $region9
    $region8: #{tpu_custom_call.1} parent=1 // pred_region
      %22 = dma.done [#allocation3], 256
    $region9: #{tpu_custom_call.1} parent=1 // pred_fallthru
      _
    %v23 = vld [vmem:[#allocation2] sm:$0xff]
    %v24 = vld [vmem:[#allocation2 + $0x8] sm:$0xff]
    %v25 = vmax.f32 %v23, 0.0
    %v26 = vmax.f32 %v24, 0.0
    %27 = vst [vmem:[#allocation5] sm:$0xff] %v25
    %28 = vst [vmem:[#allocation5 + $0x8] sm:$0xff] %v26
    // Predicated region
    $region10: #{tpu_custom_call.1} parent=1 // pred_check
      _
    $region11: #{tpu_custom_call.1} parent=1 // pred_check_branch
      %30 = sbr.rel (0) target = $region13
    $region12: #{tpu_custom_call.1} parent=1 // pred_region
      %s32 = ssub.s32 256, 256
      %33 = vsyncadd [#allocation4], %s32
      %s34 = sshll.u32 [#allocation5], 4
      %s35 = int_to_ptr.vmem [resolvable:$true] %s34
      %40 = dma.vmem_to_hbm [thread:$0]  %s35, 256, %s1, [#allocation4], 128, 128, 8
    $region13: #{tpu_custom_call.1} parent=1 // pred_fallthru
      _
    // Predicated region
    $region14: #{tpu_custom_call.1} parent=1 // pred_check
      _
    $region15: #{tpu_custom_call.1} parent=1 // pred_check_branch
      %42 = sbr.rel (0) target = $region17
    $region16: #{tpu_custom_call.1} parent=1 // pred_region
      %43 = dma.done [#allocation4], 256
    $region17: #{tpu_custom_call.1} parent=1 // pred_fallthru
      _
    %44 = vsyncpa [#allocation3], 1
    %45 = vsyncpa [#allocation4], 1

</llo_original>
